<compile_context>
chip_gen: v7x
topology: tpu7x:2x2x1
jax: 0.10.0
libtpu: 0.0.40
codegen_flags: <defaults>
</compile_context>

<pallas_src>
import functools

import jax
import jax.numpy as jnp
from jax import lax
from jax.experimental import pallas as pl
from jax.experimental.pallas import tpu as pltpu


def _instance_loss_kernel(x_row_ref, x_col_ref, m_ref, o_ref, *, margin, tile):
    i = pl.program_id(0)          # row-block index
    j = pl.program_id(1)          # col-block index (reduction axis)

    @pl.when(j == 0)
    def _init():
        o_ref[...] = jnp.zeros_like(o_ref)

    m = m_ref[...].astype(jnp.float32)                    # (T, T)
    same = x_row_ref[...] == x_col_ref[...]               # (T,1)==(1,T) -> (T,T) bool

    # same label  -> 1 - m   (positive term;  negative term is 0)
    # diff label  -> relu(m - margin)         (negative term; positive is 0)
    contrib = jnp.where(same, 1.0 - m, jnp.maximum(m - margin, 0.0))

    def fold(c):
        # (T, T) -> (T//8, 8, T) is a free regrouping of sublane tiles;
        # sum over the leading axis = pure VPU vreg adds (no XLU).
        return c.reshape(tile // 8, 8, tile).sum(axis=0)

    @pl.when(i != j)
    def _offdiag():
        o_ref[...] += fold(contrib)

    @pl.when(i == j)
    def _diag():
        # Only diagonal tiles touch the true diagonal: self-pairs contribute 0.
        r = lax.broadcasted_iota(jnp.int32, (tile, tile), 0)
        c = lax.broadcasted_iota(jnp.int32, (tile, tile), 1)
        o_ref[...] += fold(jnp.where(r == c, 0.0, contrib))


def instance_loss(matrix, x, margin=0.2, tile=512):
    """matrix: (N, N) similarity matrix (f32/bf16); x: (N,) int instance labels."""
    n = matrix.shape[0]
    assert matrix.shape == (n, n)
    x = x.reshape(n).astype(jnp.int32)

    # Tile must satisfy the (8, 128) layout rule; use square tiles so a
    # diagonal tile <=> (i == j).
    n_pad_min = ((n + 127) // 128) * 128
    t = min(int(tile), n_pad_min)
    n_pad = ((n + t - 1) // t) * t
    nb = n_pad // t
    pad = n_pad - n

    if pad:
        m_p = jnp.pad(matrix, ((0, pad), (0, pad)))       # padded entries = 0
        # Unique sentinels strictly below every real label: never match anything.
        sentinels = jnp.min(x) - 1 - jnp.arange(pad, dtype=jnp.int32)
        x_p = jnp.concatenate([x, sentinels])
    else:
        m_p, x_p = matrix, x

    x_row = x_p.reshape(n_pad, 1)
    x_col = x_p.reshape(1, n_pad)

    partial = pl.pallas_call(
        functools.partial(_instance_loss_kernel, margin=float(margin), tile=t),
        out_shape=jax.ShapeDtypeStruct((nb * 8, t), jnp.float32),
        grid_spec=pltpu.PrefetchScalarGridSpec(
            num_scalar_prefetch=0,
            grid=(nb, nb),
            in_specs=[
                pl.BlockSpec((t, 1), lambda i, j: (i, 0)),   # row labels
                pl.BlockSpec((1, t), lambda i, j: (0, j)),   # col labels
                pl.BlockSpec((t, t), lambda i, j: (i, j)),   # matrix tile
            ],
            out_specs=pl.BlockSpec((8, t), lambda i, j: (i, 0)),
        ),
        compiler_params=pltpu.CompilerParams(
            dimension_semantics=("parallel", "arbitrary"),
            vmem_limit_bytes=32 * 1024 * 1024,
        ),
    )(x_row, x_col, m_p)

    # Tiny epilogue reduction of the lane-dense partials -> scalar.
    return jnp.sum(partial)


def _instance_loss_ref(matrix, x, margin=0.2):
    """Pure-JAX reference mirroring the PyTorch module."""
    n = x.shape[0]
    z = (x[:, None] == x[None, :]).astype(jnp.float32)
    eye = jnp.eye(n, dtype=jnp.float32)
    positive = (1.0 - eye) * z - (1.0 - eye) * z * matrix.astype(jnp.float32)
    negative = jnp.maximum((1.0 - z) * matrix.astype(jnp.float32) - margin, 0.0)
    return jnp.sum(positive + negative)


if __name__ == "__main__":
    key = jax.random.PRNGKey(0)

    # Test 1: tiny instance batch (single diagonal tile, padded to 128).
    k_m, k_x = jax.random.split(key)
    N = 8
    matrix = jax.random.uniform(k_m, (N, N), dtype=jnp.float32)
    x = jax.random.randint(k_x, (N,), 0, 4, dtype=jnp.int32)

    loss = instance_loss(matrix, x, margin=0.2)
    jax.block_until_ready(loss)
    ref = _instance_loss_ref(matrix, x, margin=0.2)
    assert jnp.allclose(loss, ref, rtol=1e-5, atol=1e-3), (loss, ref)

    # Test 2: non-multiple-of-128 size with a 2x2 tile grid (exercises padding,
    # off-diagonal tiles and the cross-tile accumulation path).
    k_m2, k_x2 = jax.random.split(jax.random.PRNGKey(1))
    N2 = 200
    matrix2 = jax.random.uniform(k_m2, (N2, N2), dtype=jnp.float32)
    x2 = jax.random.randint(k_x2, (N2,), 0, 16, dtype=jnp.int32)

    loss2 = instance_loss(matrix2, x2, margin=0.2, tile=128)
    jax.block_until_ready(loss2)
    ref2 = _instance_loss_ref(matrix2, x2, margin=0.2)
    assert jnp.allclose(loss2, ref2, rtol=1e-4, atol=1e-2), (loss2, ref2)

    print("KERNEL_OK")
</pallas_src>

<mosaic_0001>
module attributes {stable_mosaic.version = 11 : i64} {
  func.func @_instance_loss_kernel(%arg0: i32, %arg1: i32, %arg2: memref<128x1xi32, #tpu.memory_space<vmem>>, %arg3: memref<1x128xi32, #tpu.memory_space<vmem>>, %arg4: memref<128x128xf32, #tpu.memory_space<vmem>>, %arg5: memref<8x128xf32, #tpu.memory_space<vmem>>) attributes {dimension_semantics = [#tpu.dimension_semantics<parallel>, #tpu.dimension_semantics<arbitrary>], iteration_bounds = array<i64: 1, 1>, scalar_prefetch = 0 : i64, scratch_operands = 0 : i64, tpu.core_type = #tpu.core_type<tc>, window_params = [{transform_indices = @transform_0, window_bounds = array<i64: 128, 1>}, {transform_indices = @transform_1, window_bounds = array<i64: 1, 128>}, {transform_indices = @transform_2, window_bounds = array<i64: 128, 128>}, {transform_indices = @transform_3, window_bounds = array<i64: 8, 128>}]} {
    %c0_i32 = arith.constant 0 : i32
    %0 = arith.cmpi eq, %arg1, %c0_i32 : i32
    %1 = arith.extui %0 : i1 to i32
    %c0_i32_0 = arith.constant 0 : i32
    %2 = arith.cmpi ne, %1, %c0_i32_0 : i32
    scf.if %2 {
      %cst_10 = arith.constant 0.000000e+00 : f32
      %22 = vector.broadcast %cst_10 : f32 to vector<8x128xf32>
      %c0_11 = arith.constant 0 : index
      %c0_12 = arith.constant 0 : index
      %23 = vector.load %arg5[%c0_11, %c0_12] : memref<8x128xf32, #tpu.memory_space<vmem>>, vector<8x128xf32>
      tpu.vector_store %arg5[%c0_11, %c0_12], %22 {strides = array<i32>} : memref<8x128xf32, #tpu.memory_space<vmem>>, vector<8x128xf32>,
    } else {
    }
    %c0 = arith.constant 0 : index
    %c0_1 = arith.constant 0 : index
    %3 = vector.load %arg4[%c0, %c0_1] : memref<128x128xf32, #tpu.memory_space<vmem>>, vector<128x128xf32>
    %c0_2 = arith.constant 0 : index
    %c0_3 = arith.constant 0 : index
    %4 = vector.load %arg2[%c0_2, %c0_3] : memref<128x1xi32, #tpu.memory_space<vmem>>, vector<128x1xi32>
    %c0_4 = arith.constant 0 : index
    %c0_5 = arith.constant 0 : index
    %5 = vector.load %arg3[%c0_4, %c0_5] : memref<1x128xi32, #tpu.memory_space<vmem>>, vector<1x128xi32>
    %6 = vector.broadcast %4 : vector<128x1xi32> to vector<128x128xi32>
    %7 = vector.broadcast %5 : vector<1x128xi32> to vector<128x128xi32>
    %8 = arith.cmpi eq, %6, %7 : vector<128x128xi32>
    %cst = arith.constant 1.000000e+00 : f32
    %9 = vector.broadcast %cst : f32 to vector<128x128xf32>
    %10 = arith.subf %9, %3 : vector<128x128xf32>
    %cst_6 = arith.constant 2.000000e-01 : f32
    %11 = vector.broadcast %cst_6 : f32 to vector<128x128xf32>
    %12 = arith.subf %3, %11 : vector<128x128xf32>
    %cst_7 = arith.constant 0.000000e+00 : f32
    %13 = vector.broadcast %cst_7 : f32 to vector<128x128xf32>
    %14 = arith.maximumf %12, %13 : vector<128x128xf32>
    %15 = arith.select %8, %10, %14 : vector<128x128xi1>, vector<128x128xf32>
    %16 = arith.cmpi ne, %arg0, %arg1 : i32
    %17 = arith.extui %16 : i1 to i32
    %c0_i32_8 = arith.constant 0 : i32
    %18 = arith.cmpi ne, %17, %c0_i32_8 : i32
    scf.if %18 {
      %c0_10 = arith.constant 0 : index
      %c0_11 = arith.constant 0 : index
      %22 = vector.load %arg5[%c0_10, %c0_11] : memref<8x128xf32, #tpu.memory_space<vmem>>, vector<8x128xf32>
      %23 = vector.shape_cast %15 : vector<128x128xf32> to vector<16x8x128xf32>
      %cst_12 = arith.constant dense<0.000000e+00> : vector<8x128xf32>
      %24 = vector.multi_reduction <add>, %23, %cst_12 [0] : vector<16x8x128xf32> to vector<8x128xf32>
      %25 = arith.addf %22, %24 : vector<8x128xf32>
      %c0_13 = arith.constant 0 : index
      %c0_14 = arith.constant 0 : index
      %26 = vector.load %arg5[%c0_13, %c0_14] : memref<8x128xf32, #tpu.memory_space<vmem>>, vector<8x128xf32>
      tpu.vector_store %arg5[%c0_13, %c0_14], %25 {strides = array<i32>} : memref<8x128xf32, #tpu.memory_space<vmem>>, vector<8x128xf32>,
    } else {
    }
    %19 = arith.cmpi eq, %arg0, %arg1 : i32
    %20 = arith.extui %19 : i1 to i32
    %c0_i32_9 = arith.constant 0 : i32
    %21 = arith.cmpi ne, %20, %c0_i32_9 : i32
    scf.if %21 {
      %22 = tpu.iota {dimensions = array<i32: 0>} : vector<128x128xi32>
      %23 = tpu.iota {dimensions = array<i32: 1>} : vector<128x128xi32>
      %c0_10 = arith.constant 0 : index
      %c0_11 = arith.constant 0 : index
      %24 = vector.load %arg5[%c0_10, %c0_11] : memref<8x128xf32, #tpu.memory_space<vmem>>, vector<8x128xf32>
      %25 = arith.cmpi eq, %22, %23 : vector<128x128xi32>
      %cst_12 = arith.constant 0.000000e+00 : f32
      %26 = vector.broadcast %cst_12 : f32 to vector<128x128xf32>
      %27 = arith.select %25, %26, %15 : vector<128x128xi1>, vector<128x128xf32>
      %28 = vector.shape_cast %27 : vector<128x128xf32> to vector<16x8x128xf32>
      %cst_13 = arith.constant dense<0.000000e+00> : vector<8x128xf32>
      %29 = vector.multi_reduction <add>, %28, %cst_13 [0] : vector<16x8x128xf32> to vector<8x128xf32>
      %30 = arith.addf %24, %29 : vector<8x128xf32>
      %c0_14 = arith.constant 0 : index
      %c0_15 = arith.constant 0 : index
      %31 = vector.load %arg5[%c0_14, %c0_15] : memref<8x128xf32, #tpu.memory_space<vmem>>, vector<8x128xf32>
      tpu.vector_store %arg5[%c0_14, %c0_15], %30 {strides = array<i32>} : memref<8x128xf32, #tpu.memory_space<vmem>>, vector<8x128xf32>,
    } else {
    }
    return
  }
  func.func @transform_0(%arg0: i32, %arg1: i32) -> (i32, i32) {
    %c0_i32 = arith.constant 0 : i32
    %c0_i32_0 = arith.constant 0 : i32
    return %arg0, %c0_i32 : i32, i32
  }
  func.func @transform_1(%arg0: i32, %arg1: i32) -> (i32, i32) {
    %c0_i32 = arith.constant 0 : i32
    %c0_i32_0 = arith.constant 0 : i32
    return %c0_i32, %arg1 : i32, i32
  }
  func.func @transform_2(%arg0: i32, %arg1: i32) -> (i32, i32) {
    %c0_i32 = arith.constant 0 : i32
    return %arg0, %arg1 : i32, i32
  }
  func.func @transform_3(%arg0: i32, %arg1: i32) -> (i32, i32) {
    %c0_i32 = arith.constant 0 : i32
    %c0_i32_0 = arith.constant 0 : i32
    return %arg0, %c0_i32 : i32, i32
  }
}

</mosaic_0001>

<llo_original>
// kernel: tpu_custom_call.1
$region0: #{tpu_custom_call.1}
  #allocation0 [shape = 'u32[]', space=smem, size = 0x4, offset = 0x4, fixed_abs, tag = 'smem constant byte address 0x4 - core index']
  #allocation1 [shape = 'u32[144,128]{1,0:T(1,128)}', space=vmem, size = 0x12000, scoped, tag = 'internal scratch']
  %s0 = inlined_call_operand.vmem [shape: s32[128,1], index: 0, kind: input, shape index: {}]
  %s1 = inlined_call_operand.vmem [shape: s32[1,128], index: 1, kind: input, shape index: {}]
  %s2 = inlined_call_operand.vmem [shape: f32[128,128], index: 2, kind: input, shape index: {}]
  %s3 = inlined_call_operand.hbm [shape: f32[8,128], index: 3, kind: output, shape index: {}]
  %s4 = sld [smem:[#allocation0]]
  $region34: #{tpu_custom_call.1} parent=0
    _
  %s6 = ssub.s32 1, %s4
  %s7 = scalar_select 0, %s6, %s4
  $region1: #{tpu_custom_call.1} parent=0
    #allocation2 [shape = 'u8[4096]{0}', space=vmem, size = 0x1000, scoped, tag = 'output window, operand 0, single buffered']
    #allocation3 [shape = 's32[1]{0}', space=sflag, size = 0x4, scoped, tag = 'scoped memory for tpu_custom_call.1']
    %8 = vsyncpa [#allocation3], 0
    // Predicated region
    $region2: #{tpu_custom_call.1} parent=1 // pred_check
      _
    $region3: #{tpu_custom_call.1} parent=1 // pred_check_branch
      %10 = sbr.rel (0) target = $region5
    $region4: #{tpu_custom_call.1} parent=1 // pred_region
      _
    $region5: #{tpu_custom_call.1} parent=1 // pred_fallthru
      _
    // Predicated region
    $region6: #{tpu_custom_call.1} parent=1 // pred_check
      _
    $region7: #{tpu_custom_call.1} parent=1 // pred_check_branch
      %12 = sbr.rel (0) target = $region9
    $region8: #{tpu_custom_call.1} parent=1 // pred_region
      _
    $region9: #{tpu_custom_call.1} parent=1 // pred_fallthru
      _
    // Predicated region
    $region10: #{tpu_custom_call.1} parent=1 // pred_check
      _
    $region11: #{tpu_custom_call.1} parent=1 // pred_check_branch
      %14 = sbr.rel (0) target = $region13
    $region12: #{tpu_custom_call.1} parent=1 // pred_region
      _
    $region13: #{tpu_custom_call.1} parent=1 // pred_fallthru
      _
    %p15 = scmp.eq.s32.totalorder 0, 0
    // Predicated region
    $region14: #{tpu_custom_call.1} parent=1 // pred_check
      %p16 = pneg %p15
    $region15: #{tpu_custom_call.1} parent=1 // pred_check_branch
      %18 = sbr.rel (%p16) target = $region17
    $region16: #{tpu_custom_call.1} parent=1 // pred_region
      %19 = vst [vmem:[#allocation2] sm:$0xff] 0.0
    $region17: #{tpu_custom_call.1} parent=1 // pred_fallthru
      _
    %v20 = vld [vmem:[%s2] sm:$0xff]
    %v21 = vld [vmem:[%s2 + $0x8] sm:$0xff]
    %v22 = vld [vmem:[%s2 + $0x10] sm:$0xff]
    %v23 = vld [vmem:[%s2 + $0x18] sm:$0xff]
    %v24 = vld [vmem:[%s2 + $0x20] sm:$0xff]
    %v25 = vld [vmem:[%s2 + $0x28] sm:$0xff]
    %v26 = vld [vmem:[%s2 + $0x30] sm:$0xff]
    %v27 = vld [vmem:[%s2 + $0x38] sm:$0xff]
    %v28 = vld [vmem:[%s2 + $0x40] sm:$0xff]
    %v29 = vld [vmem:[%s2 + $0x48] sm:$0xff]
    %v30 = vld [vmem:[%s2 + $0x50] sm:$0xff]
    %v31 = vld [vmem:[%s2 + $0x58] sm:$0xff]
    %v32 = vld [vmem:[%s2 + $0x60] sm:$0xff]
    %v33 = vld [vmem:[%s2 + $0x68] sm:$0xff]
    %v34 = vld [vmem:[%s2 + $0x70] sm:$0xff]
    %v35 = vld [vmem:[%s2 + $0x78] sm:$0xff]
    %v36 = vld [vmem:[%s0] sm:$0xff]
    %v37 = vld [vmem:[%s0 + $0x8] sm:$0xff]
    %v38 = vld [vmem:[%s0 + $0x10] sm:$0xff]
    %v39 = vld [vmem:[%s0 + $0x18] sm:$0xff]
    %v40 = vld [vmem:[%s0 + $0x20] sm:$0xff]
    %v41 = vld [vmem:[%s0 + $0x28] sm:$0xff]
    %v42 = vld [vmem:[%s0 + $0x30] sm:$0xff]
    %v43 = vld [vmem:[%s0 + $0x38] sm:$0xff]
    %v44 = vld [vmem:[%s0 + $0x40] sm:$0xff]
    %v45 = vld [vmem:[%s0 + $0x48] sm:$0xff]
    %v46 = vld [vmem:[%s0 + $0x50] sm:$0xff]
    %v47 = vld [vmem:[%s0 + $0x58] sm:$0xff]
    %v48 = vld [vmem:[%s0 + $0x60] sm:$0xff]
    %v49 = vld [vmem:[%s0 + $0x68] sm:$0xff]
    %v50 = vld [vmem:[%s0 + $0x70] sm:$0xff]
    %v51 = vld [vmem:[%s0 + $0x78] sm:$0xff]
    %v52 = vld [vmem:[%s1] sm:$0x1]
    %53 = vset.pattern.permute.xlu0 0
    %54 = vperm.xlu0 %53, %v36
    %v55 = vpop.permute.xlu0 %54
    %56 = vset.pattern.permute.xlu0 0
    %57 = vperm.xlu0 %56, %v37
    %v58 = vpop.permute.xlu0 %57
    %59 = vset.pattern.permute.xlu0 0
    %60 = vperm.xlu0 %59, %v38
    %v61 = vpop.permute.xlu0 %60
    %62 = vset.pattern.permute.xlu0 0
    %63 = vperm.xlu0 %62, %v39
    %v64 = vpop.permute.xlu0 %63
    %65 = vset.pattern.permute.xlu0 0
    %66 = vperm.xlu0 %65, %v40
    %v67 = vpop.permute.xlu0 %66
    %68 = vset.pattern.permute.xlu0 0
    %69 = vperm.xlu0 %68, %v41
    %v70 = vpop.permute.xlu0 %69
    %71 = vset.pattern.permute.xlu0 0
    %72 = vperm.xlu0 %71, %v42
    %v73 = vpop.permute.xlu0 %72
    %74 = vset.pattern.permute.xlu0 0
    %75 = vperm.xlu0 %74, %v43
    %v76 = vpop.permute.xlu0 %75
    %77 = vset.pattern.permute.xlu0 0
    %78 = vperm.xlu0 %77, %v44
    %v79 = vpop.permute.xlu0 %78
    %80 = vset.pattern.permute.xlu0 0
    %81 = vperm.xlu0 %80, %v45
    %v82 = vpop.permute.xlu0 %81
    %83 = vset.pattern.permute.xlu0 0
    %84 = vperm.xlu0 %83, %v46
    %v85 = vpop.permute.xlu0 %84
    %86 = vset.pattern.permute.xlu0 0
    %87 = vperm.xlu0 %86, %v47
    %v88 = vpop.permute.xlu0 %87
    %89 = vset.pattern.permute.xlu0 0
    %90 = vperm.xlu0 %89, %v48
    %v91 = vpop.permute.xlu0 %90
    %92 = vset.pattern.permute.xlu0 0
    %93 = vperm.xlu0 %92, %v49
    %v94 = vpop.permute.xlu0 %93
    %95 = vset.pattern.permute.xlu0 0
    %96 = vperm.xlu0 %95, %v50
    %v97 = vpop.permute.xlu0 %96
    %98 = vset.pattern.permute.xlu0 0
    %99 = vperm.xlu0 %98, %v51
    %v100 = vpop.permute.xlu0 %99
    %v101 = vlaneseq
    %v102 = vshrl.u32 %v101, 7
    %v103 = vsub.s32 0, %v102
    %v104 = vrot.slane %v52, %v103
    %vm105 = vcmp.eq.s32.totalorder %v55, %v104
    %vm106 = vcmp.eq.s32.totalorder %v58, %v104
    %vm107 = vcmp.eq.s32.totalorder %v61, %v104
    %vm108 = vcmp.eq.s32.totalorder %v64, %v104
    %vm109 = vcmp.eq.s32.totalorder %v67, %v104
    %vm110 = vcmp.eq.s32.totalorder %v70, %v104
    %vm111 = vcmp.eq.s32.totalorder %v73, %v104
    %vm112 = vcmp.eq.s32.totalorder %v76, %v104
    %vm113 = vcmp.eq.s32.totalorder %v79, %v104
    %vm114 = vcmp.eq.s32.totalorder %v82, %v104
    %vm115 = vcmp.eq.s32.totalorder %v85, %v104
    %vm116 = vcmp.eq.s32.totalorder %v88, %v104
    %vm117 = vcmp.eq.s32.totalorder %v91, %v104
    %vm118 = vcmp.eq.s32.totalorder %v94, %v104
    %vm119 = vcmp.eq.s32.totalorder %v97, %v104
    %vm120 = vcmp.eq.s32.totalorder %v100, %v104
    %v121 = vsub.f32 1.0, %v20
    %v122 = vsub.f32 1.0, %v21
    %v123 = vsub.f32 1.0, %v22
    %v124 = vsub.f32 1.0, %v23
    %v125 = vsub.f32 1.0, %v24
    %v126 = vsub.f32 1.0, %v25
    %v127 = vsub.f32 1.0, %v26
    %v128 = vsub.f32 1.0, %v27
    %v129 = vsub.f32 1.0, %v28
    %v130 = vsub.f32 1.0, %v29
    %v131 = vsub.f32 1.0, %v30
    %v132 = vsub.f32 1.0, %v31
    %v133 = vsub.f32 1.0, %v32
    %v134 = vsub.f32 1.0, %v33
    %v135 = vsub.f32 1.0, %v34
    %v136 = vsub.f32 1.0, %v35
    %v137 = vsub.f32 %v20, 0.2
    %v138 = vsub.f32 %v21, 0.2
    %v139 = vsub.f32 %v22, 0.2
    %v140 = vsub.f32 %v23, 0.2
    %v141 = vsub.f32 %v24, 0.2
    %v142 = vsub.f32 %v25, 0.2
    %v143 = vsub.f32 %v26, 0.2
    %v144 = vsub.f32 %v27, 0.2
    %v145 = vsub.f32 %v28, 0.2
    %v146 = vsub.f32 %v29, 0.2
    %v147 = vsub.f32 %v30, 0.2
    %v148 = vsub.f32 %v31, 0.2
    %v149 = vsub.f32 %v32, 0.2
    %v150 = vsub.f32 %v33, 0.2
    %v151 = vsub.f32 %v34, 0.2
    %v152 = vsub.f32 %v35, 0.2
    %v153 = vmax.f32 %v137, 0.0
    %v154 = vmax.f32 %v138, 0.0
    %v155 = vmax.f32 %v139, 0.0
    %v156 = vmax.f32 %v140, 0.0
    %v157 = vmax.f32 %v141, 0.0
    %v158 = vmax.f32 %v142, 0.0
    %v159 = vmax.f32 %v143, 0.0
    %v160 = vmax.f32 %v144, 0.0
    %v161 = vmax.f32 %v145, 0.0
    %v162 = vmax.f32 %v146, 0.0
    %v163 = vmax.f32 %v147, 0.0
    %v164 = vmax.f32 %v148, 0.0
    %v165 = vmax.f32 %v149, 0.0
    %v166 = vmax.f32 %v150, 0.0
    %v167 = vmax.f32 %v151, 0.0
    %v168 = vmax.f32 %v152, 0.0
    %v169 = vsel %vm105, %v121, %v153
    %v170 = vsel %vm106, %v122, %v154
    %v171 = vsel %vm107, %v123, %v155
    %v172 = vsel %vm108, %v124, %v156
    %v173 = vsel %vm109, %v125, %v157
    %v174 = vsel %vm110, %v126, %v158
    %v175 = vsel %vm111, %v127, %v159
    %v176 = vsel %vm112, %v128, %v160
    %v177 = vsel %vm113, %v129, %v161
    %v178 = vsel %vm114, %v130, %v162
    %v179 = vsel %vm115, %v131, %v163
    %v180 = vsel %vm116, %v132, %v164
    %v181 = vsel %vm117, %v133, %v165
    %v182 = vsel %vm118, %v134, %v166
    %v183 = vsel %vm119, %v135, %v167
    %v184 = vsel %vm120, %v136, %v168
    %p185 = scmp.ne.s32.totalorder 0, 0
    // Predicated region
    $region18: #{tpu_custom_call.1} parent=1 // pred_check
      %p186 = pneg %p185
    $region19: #{tpu_custom_call.1} parent=1 // pred_check_branch
      %188 = sbr.rel (%p186) target = $region21
    $region20: #{tpu_custom_call.1} parent=1 // pred_region
      %v189 = vld [vmem:[#allocation2] sm:$0xff]
      %v190 = vadd.f32 %v169, %v170
      %v191 = vadd.f32 %v190, %v171
      %v192 = vadd.f32 %v191, %v172
      %v193 = vadd.f32 %v192, %v173
      %v194 = vadd.f32 %v193, %v174
      %v195 = vadd.f32 %v194, %v175
      %v196 = vadd.f32 %v195, %v176
      %v197 = vadd.f32 %v196, %v177
      %v198 = vadd.f32 %v197, %v178
      %v199 = vadd.f32 %v198, %v179
      %v200 = vadd.f32 %v199, %v180
      %v201 = vadd.f32 %v200, %v181
      %v202 = vadd.f32 %v201, %v182
      %v203 = vadd.f32 %v202, %v183
      %v204 = vadd.f32 %v203, %v184
      %v205 = vadd.f32 %v189, %v204
      %206 = vst [vmem:[#allocation2] sm:$0xff] %v205
    $region21: #{tpu_custom_call.1} parent=1 // pred_fallthru
      _
    %p207 = scmp.eq.s32.totalorder 0, 0
    // Predicated region
    $region22: #{tpu_custom_call.1} parent=1 // pred_check
      %p208 = pneg %p207
    $region23: #{tpu_custom_call.1} parent=1 // pred_check_branch
      %210 = sbr.rel (%p208) target = $region25
    $region24: #{tpu_custom_call.1} parent=1 // pred_region
      %v211 = vlaneseq
      %v212 = vshrl.u32 %v211, 7
      %v213 = vadd.s32 %v212, 8
      %v214 = vadd.s32 %v212, 16
      %v215 = vadd.s32 %v212, 24
      %v216 = vadd.s32 %v212, 32
      %v217 = vadd.s32 %v212, 40
      %v218 = vadd.s32 %v212, 48
      %v219 = vadd.s32 %v212, 56
      %v220 = vadd.s32 %v212, 64
      %v221 = vadd.s32 %v212, 72
      %v222 = vadd.s32 %v212, 80
      %v223 = vadd.s32 %v212, 88
      %v224 = vadd.s32 %v212, 96
      %v225 = vadd.s32 %v212, 104
      %v226 = vadd.s32 %v212, 112
      %v227 = vadd.s32 %v212, 120
      %v228 = vlaneseq
      %v229 = vand.u32 %v228, 127
      %v230 = vld [vmem:[#allocation2] sm:$0xff]
      %vm231 = vcmp.eq.s32.totalorder %v212, %v229
      %vm232 = vcmp.eq.s32.totalorder %v213, %v229
      %vm233 = vcmp.eq.s32.totalorder %v214, %v229
      %vm234 = vcmp.eq.s32.totalorder %v215, %v229
      %vm235 = vcmp.eq.s32.totalorder %v216, %v229
      %vm236 = vcmp.eq.s32.totalorder %v217, %v229
      %vm237 = vcmp.eq.s32.totalorder %v218, %v229
      %vm238 = vcmp.eq.s32.totalorder %v219, %v229
      %vm239 = vcmp.eq.s32.totalorder %v220, %v229
      %vm240 = vcmp.eq.s32.totalorder %v221, %v229
      %vm241 = vcmp.eq.s32.totalorder %v222, %v229
      %vm242 = vcmp.eq.s32.totalorder %v223, %v229
      %vm243 = vcmp.eq.s32.totalorder %v224, %v229
      %vm244 = vcmp.eq.s32.totalorder %v225, %v229
      %vm245 = vcmp.eq.s32.totalorder %v226, %v229
      %vm246 = vcmp.eq.s32.totalorder %v227, %v229
      %v247 = vsel %vm231, 0.0, %v169
      %v248 = vsel %vm232, 0.0, %v170
      %v249 = vsel %vm233, 0.0, %v171
      %v250 = vsel %vm234, 0.0, %v172
      %v251 = vsel %vm235, 0.0, %v173
      %v252 = vsel %vm236, 0.0, %v174
      %v253 = vsel %vm237, 0.0, %v175
      %v254 = vsel %vm238, 0.0, %v176
      %v255 = vsel %vm239, 0.0, %v177
      %v256 = vsel %vm240, 0.0, %v178
      %v257 = vsel %vm241, 0.0, %v179
      %v258 = vsel %vm242, 0.0, %v180
      %v259 = vsel %vm243, 0.0, %v181
      %v260 = vsel %vm244, 0.0, %v182
      %v261 = vsel %vm245, 0.0, %v183
      %v262 = vsel %vm246, 0.0, %v184
      %v263 = vadd.f32 %v247, %v248
      %v264 = vadd.f32 %v263, %v249
      %v265 = vadd.f32 %v264, %v250
      %v266 = vadd.f32 %v265, %v251
      %v267 = vadd.f32 %v266, %v252
      %v268 = vadd.f32 %v267, %v253
      %v269 = vadd.f32 %v268, %v254
      %v270 = vadd.f32 %v269, %v255
      %v271 = vadd.f32 %v270, %v256
      %v272 = vadd.f32 %v271, %v257
      %v273 = vadd.f32 %v272, %v258
      %v274 = vadd.f32 %v273, %v259
      %v275 = vadd.f32 %v274, %v260
      %v276 = vadd.f32 %v275, %v261
      %v277 = vadd.f32 %v276, %v262
      %v278 = vadd.f32 %v230, %v277
      %279 = vst [vmem:[#allocation2] sm:$0xff] %v278
    $region25: #{tpu_custom_call.1} parent=1 // pred_fallthru
      _
    // Predicated region
    $region26: #{tpu_custom_call.1} parent=1 // pred_check
      _
    $region27: #{tpu_custom_call.1} parent=1 // pred_check_branch
      %281 = sbr.rel (0) target = $region29
    $region28: #{tpu_custom_call.1} parent=1 // pred_region
      %s283 = ssub.s32 128, 128
      %284 = vsyncadd [#allocation3], %s283
      %s286 = sshll.u32 [#allocation2], 4
      %s287 = int_to_ptr.vmem [resolvable:$true] %s286
      %289 = dma.vmem_to_hbm [thread:$0]  %s287, 128, %s3, [#allocation3]
    $region29: #{tpu_custom_call.1} parent=1 // pred_fallthru
      _
    // Predicated region
    $region30: #{tpu_custom_call.1} parent=1 // pred_check
      _
    $region31: #{tpu_custom_call.1} parent=1 // pred_check_branch
      %291 = sbr.rel (0) target = $region33
    $region32: #{tpu_custom_call.1} parent=1 // pred_region
      %292 = dma.done [#allocation3], 128
    $region33: #{tpu_custom_call.1} parent=1 // pred_fallthru
      _
    %293 = vsyncpa [#allocation3], 1

</llo_original>
